<compile_context>
chip_gen: v7x
topology: tpu7x:2x2x1
jax: 0.10.0
libtpu: 0.0.40
codegen_flags: <defaults>
</compile_context>

<pallas_src>
import jax
import jax.numpy as jnp
from jax.experimental import pallas as pl
from jax.experimental.pallas import tpu as pltpu

LEAKY_SLOPE = 0.01  # PyTorch nn.LeakyReLU default


def _leaky_relu(x):
    return jnp.where(x >= 0, x, LEAKY_SLOPE * x)


def _make_mlp_kernel(n_layers):
    """Fused MLP over one (tm, P*D) row tile.

    Kernel refs: x, (w, b) * n_layers, out.  All matmuls accumulate in f32 on
    the MXU; bias add and LeakyReLU run in f32 on the VPU.
    """
    def kernel(*refs):
        x_ref = refs[0]
        out_ref = refs[-1]
        wb = refs[1:-1]
        h = x_ref[...]
        for l in range(n_layers):
            w_ref, b_ref = wb[2 * l], wb[2 * l + 1]
            z = jnp.dot(h.astype(w_ref.dtype), w_ref[...],
                        preferred_element_type=jnp.float32)
            z = z + b_ref[...]
            h = _leaky_relu(z) if l < n_layers - 1 else z
        out_ref[...] = h.astype(out_ref.dtype)
    return kernel


def _block_diag(w, p):
    """(din, dout) -> (p*din, p*dout) block-diagonal replication of w."""
    if p == 1:
        return w
    din, dout = w.shape
    eye = jnp.eye(p, dtype=w.dtype)
    blk = eye[:, :, None, None] * w[None, None, :, :]       # (p, p, din, dout)
    return blk.transpose(0, 2, 1, 3).reshape(p * din, p * dout)


def _detect_num_tensorcores():
    """Best-effort TensorCore count (affects only the tile-size policy)."""
    try:
        info = pltpu.get_tpu_info()
        for attr in ("num_cores", "tensorcore_count", "core_count",
                     "num_tensorcores"):
            try:
                v = getattr(info, attr, None)
                if v is not None and int(v) > 0:
                    return int(v)
            except Exception:
                pass
    except Exception:
        pass
    try:
        kind = (getattr(jax.devices()[0], "device_kind", "") or "").lower()
        if "v7" in kind:
            return 2
    except Exception:
        pass
    return 1


def reward_net_forward(obs, act, params, *, tm=1024, use_bf16=True,
                       num_cores=None, pack=True):
    """obs: (B, F, obs_dim), act: (B, F, act_dim) -> rewards (B, F)."""
    B, F, obs_dim = obs.shape
    _, _, act_dim = act.shape
    N = B * F
    D = obs_dim + act_dim
    n_layers = len(params)
    widths = [D] + [w.shape[1] for (w, _) in params]         # last entry is 1

    in_dtype = jnp.bfloat16 if use_bf16 else jnp.float32
    itemsize = jnp.dtype(in_dtype).itemsize

    # ---- lane-packing factor: P logical rows per physical row --------------
    max_w = max(widths)
    P = max(1, min(8, 128 // max_w)) if pack else 1

    if num_cores is None:
        num_cores = _detect_num_tensorcores()

    # ---- physical-row tile size ---------------------------------------------
    m_phys = -(-N // P)                                       # packed rows needed
    tm = max(128, (int(tm) // 128) * 128)
    m_ceil = -(-m_phys // 128) * 128
    tm = min(tm, m_ceil)
    if num_cores >= 2 and m_phys >= 256:
        # Keep >= num_cores tiles so the "parallel" grid axis spans all TCs.
        tm = min(tm, -(-m_phys // (num_cores * 128)) * 128)
    n_tiles = -(-m_phys // tm)
    m_pad = n_tiles * tm
    n_log_pad = m_pad * P

    # ---- weight prep: block-diagonal replication, bf16 weights, f32 biases --
    ws, bs = [], []
    for (w, b) in params:
        ws.append(_block_diag(w, P).astype(in_dtype))
        bs.append(jnp.tile(jnp.reshape(b, (1, -1)), (1, P)).astype(jnp.float32))

    # ---- input prep: concat + cast + pad fused into one wrapper pass --------
    x2d = jnp.concatenate(
        [obs.reshape(N, obs_dim), act.reshape(N, act_dim)], axis=-1
    ).astype(in_dtype)
    if n_log_pad != N:
        x2d = jnp.pad(x2d, ((0, n_log_pad - N), (0, 0)))
    x2d = x2d.reshape(m_pad, P * D)                           # free row-major view

    def full_spec(shape):
        return pl.BlockSpec(shape, lambda i: (0,) * len(shape))

    in_specs = [pl.BlockSpec((tm, P * D), lambda i: (i, 0))]
    for w, b in zip(ws, bs):
        in_specs.append(full_spec(w.shape))
        in_specs.append(full_spec(b.shape))

    per_row_macs = sum(widths[i] * widths[i + 1] for i in range(n_layers))
    flops = 2 * n_log_pad * per_row_macs
    bytes_accessed = (n_log_pad * D * itemsize
                      + sum(int(w.size) for w in ws) * itemsize
                      + sum(int(b.size) for b in bs) * 4
                      + n_log_pad * 4)
    cost = pl.CostEstimate(flops=int(flops), transcendentals=0,
                           bytes_accessed=int(bytes_accessed))

    out = pl.pallas_call(
        _make_mlp_kernel(n_layers),
        out_shape=jax.ShapeDtypeStruct((m_pad, P), jnp.float32),
        grid_spec=pltpu.PrefetchScalarGridSpec(
            num_scalar_prefetch=0,
            grid=(n_tiles,),
            in_specs=in_specs,
            out_specs=pl.BlockSpec((tm, P), lambda i: (i, 0)),
        ),
        compiler_params=pltpu.CompilerParams(
            dimension_semantics=("parallel",)),
        cost_estimate=cost,
    )(x2d, *[a for pair in zip(ws, bs) for a in pair])

    # Packed (m_pad, P) rewards -> flat logical rows -> (B, F).
    return out.reshape(-1)[:N].reshape(B, F)


def init_reward_net_params(key, obs_dim, act_dim, hidden_dims):
    """Deterministic init mirroring nn.Linear's U(-1/sqrt(fan_in), 1/sqrt(fan_in))."""
    dims = [obs_dim + act_dim] + list(hidden_dims) + [1]
    params = []
    for i in range(len(dims) - 1):
        fan_in, fan_out = dims[i], dims[i + 1]
        key, kw, kb = jax.random.split(key, 3)
        bound = 1.0 / float(fan_in) ** 0.5
        w = jax.random.uniform(kw, (fan_in, fan_out), jnp.float32, -bound, bound)
        b = jax.random.uniform(kb, (1, fan_out), jnp.float32, -bound, bound)
        params.append((w, b))
    return params


def _reference_forward(obs, act, params):
    x = jnp.concatenate([obs, act], axis=-1)
    for i, (w, b) in enumerate(params):
        x = jnp.dot(x, w, precision=jax.lax.Precision.HIGHEST) + b
        if i < len(params) - 1:
            x = jnp.where(x >= 0, x, LEAKY_SLOPE * x)
    return jnp.squeeze(x, -1)


if __name__ == "__main__":
    key = jax.random.PRNGKey(0)
    k_obs, k_act, k_p1, k_p2 = jax.random.split(key, 4)

    # Config A: narrow hidden layers -> exercises the 4-way lane-packing path.
    B, F, obs_dim, act_dim = 3, 100, 16, 8      # N = 300 -> tiling + row padding
    hidden = [32, 32, 32]
    obs = jax.random.normal(k_obs, (B, F, obs_dim), jnp.float32)
    act = jax.random.normal(k_act, (B, F, act_dim), jnp.float32)
    params = init_reward_net_params(k_p1, obs_dim, act_dim, hidden)
    ref = _reference_forward(obs, act, params)

    # Default path: bf16 matmuls with f32 accumulation (documented accuracy choice).
    r_bf16 = jax.block_until_ready(reward_net_forward(obs, act, params))
    assert r_bf16.shape == (B, F), r_bf16.shape
    assert float(jnp.max(jnp.abs(r_bf16 - ref))) < 0.25

    # f32 path: parity with the eval-mode PyTorch forward.
    r_f32 = jax.block_until_ready(
        reward_net_forward(obs, act, params, use_bf16=False))
    err = float(jnp.max(jnp.abs(r_f32 - ref)))
    assert jnp.allclose(r_f32, ref, atol=1e-3, rtol=1e-3), err

    # Config B: module-default hidden width (256) -> unpacked (P = 1) path.
    B2, F2 = 2, 8
    obs2 = jax.random.normal(k_obs, (B2, F2, obs_dim), jnp.float32)
    act2 = jax.random.normal(k_act, (B2, F2, act_dim), jnp.float32)
    params2 = init_reward_net_params(k_p2, obs_dim, act_dim, [256, 256, 256])
    ref2 = _reference_forward(obs2, act2, params2)
    r2 = jax.block_until_ready(
        reward_net_forward(obs2, act2, params2, use_bf16=False))
    err2 = float(jnp.max(jnp.abs(r2 - ref2)))
    assert jnp.allclose(r2, ref2, atol=1e-3, rtol=1e-3), err2

    print("KERNEL_OK")
</pallas_src>

<mosaic_0001>
module attributes {stable_mosaic.version = 11 : i64} {
  func.func @kernel(%arg0: i32, %arg1: memref<128x96xbf16, #tpu.memory_space<vmem>>, %arg2: memref<96x128xbf16, #tpu.memory_space<vmem>>, %arg3: memref<1x128xf32, #tpu.memory_space<vmem>>, %arg4: memref<128x128xbf16, #tpu.memory_space<vmem>>, %arg5: memref<1x128xf32, #tpu.memory_space<vmem>>, %arg6: memref<128x128xbf16, #tpu.memory_space<vmem>>, %arg7: memref<1x128xf32, #tpu.memory_space<vmem>>, %arg8: memref<128x4xbf16, #tpu.memory_space<vmem>>, %arg9: memref<1x4xf32, #tpu.memory_space<vmem>>, %arg10: memref<128x4xf32, #tpu.memory_space<vmem>>) attributes {dimension_semantics = [#tpu.dimension_semantics<parallel>], iteration_bounds = array<i64: 1>, scalar_prefetch = 0 : i64, scratch_operands = 0 : i64, tpu.core_type = #tpu.core_type<tc>, window_params = [{transform_indices = @transform_0, window_bounds = array<i64: 128, 96>}, {pipeline_mode = #tpu.pipeline_mode<synchronous>, transform_indices = @transform_1, window_bounds = array<i64: 96, 128>}, {pipeline_mode = #tpu.pipeline_mode<synchronous>, transform_indices = @transform_2, window_bounds = array<i64: 1, 128>}, {pipeline_mode = #tpu.pipeline_mode<synchronous>, transform_indices = @transform_3, window_bounds = array<i64: 128, 128>}, {pipeline_mode = #tpu.pipeline_mode<synchronous>, transform_indices = @transform_4, window_bounds = array<i64: 1, 128>}, {pipeline_mode = #tpu.pipeline_mode<synchronous>, transform_indices = @transform_5, window_bounds = array<i64: 128, 128>}, {pipeline_mode = #tpu.pipeline_mode<synchronous>, transform_indices = @transform_6, window_bounds = array<i64: 1, 128>}, {pipeline_mode = #tpu.pipeline_mode<synchronous>, transform_indices = @transform_7, window_bounds = array<i64: 128, 4>}, {pipeline_mode = #tpu.pipeline_mode<synchronous>, transform_indices = @transform_8, window_bounds = array<i64: 1, 4>}, {transform_indices = @transform_9, window_bounds = array<i64: 128, 4>}]} {
    %c0 = arith.constant 0 : index
    %c0_0 = arith.constant 0 : index
    %0 = vector.load %arg1[%c0, %c0_0] : memref<128x96xbf16, #tpu.memory_space<vmem>>, vector<128x96xbf16>
    %c0_1 = arith.constant 0 : index
    %c0_2 = arith.constant 0 : index
    %1 = vector.load %arg2[%c0_1, %c0_2] : memref<96x128xbf16, #tpu.memory_space<vmem>>, vector<96x128xbf16>
    %cst = arith.constant dense<0.000000e+00> : vector<128x128xf32>
    %2 = tpu.matmul %0, %1, %cst {dimension_numbers = #tpu.dot_dimension_numbers<[1], [0], [0], [1], [0, 0, 1, 1], [], []>} : vector<128x96xbf16>, vector<96x128xbf16>, vector<128x128xf32> -> vector<128x128xf32>
    %c0_3 = arith.constant 0 : index
    %c0_4 = arith.constant 0 : index
    %3 = vector.load %arg3[%c0_3, %c0_4] : memref<1x128xf32, #tpu.memory_space<vmem>>, vector<1x128xf32>
    %4 = vector.broadcast %3 : vector<1x128xf32> to vector<128x128xf32>
    %5 = arith.addf %2, %4 : vector<128x128xf32>
    %cst_5 = arith.constant 0.000000e+00 : f32
    %6 = vector.broadcast %cst_5 : f32 to vector<128x128xf32>
    %7 = arith.cmpf oge, %5, %6 : vector<128x128xf32>
    %cst_6 = arith.constant 0.00999999977 : f32
    %8 = vector.broadcast %cst_6 : f32 to vector<128x128xf32>
    %9 = arith.mulf %8, %5 : vector<128x128xf32>
    %10 = arith.select %7, %5, %9 : vector<128x128xi1>, vector<128x128xf32>
    %11 = arith.truncf %10 : vector<128x128xf32> to vector<128x128xbf16>
    %c0_7 = arith.constant 0 : index
    %c0_8 = arith.constant 0 : index
    %12 = vector.load %arg4[%c0_7, %c0_8] : memref<128x128xbf16, #tpu.memory_space<vmem>>, vector<128x128xbf16>
    %cst_9 = arith.constant dense<0.000000e+00> : vector<128x128xf32>
    %13 = tpu.matmul %11, %12, %cst_9 {dimension_numbers = #tpu.dot_dimension_numbers<[1], [0], [0], [1], [0, 0, 1, 1], [], []>} : vector<128x128xbf16>, vector<128x128xbf16>, vector<128x128xf32> -> vector<128x128xf32>
    %c0_10 = arith.constant 0 : index
    %c0_11 = arith.constant 0 : index
    %14 = vector.load %arg5[%c0_10, %c0_11] : memref<1x128xf32, #tpu.memory_space<vmem>>, vector<1x128xf32>
    %15 = vector.broadcast %14 : vector<1x128xf32> to vector<128x128xf32>
    %16 = arith.addf %13, %15 : vector<128x128xf32>
    %cst_12 = arith.constant 0.000000e+00 : f32
    %17 = vector.broadcast %cst_12 : f32 to vector<128x128xf32>
    %18 = arith.cmpf oge, %16, %17 : vector<128x128xf32>
    %cst_13 = arith.constant 0.00999999977 : f32
    %19 = vector.broadcast %cst_13 : f32 to vector<128x128xf32>
    %20 = arith.mulf %19, %16 : vector<128x128xf32>
    %21 = arith.select %18, %16, %20 : vector<128x128xi1>, vector<128x128xf32>
    %22 = arith.truncf %21 : vector<128x128xf32> to vector<128x128xbf16>
    %c0_14 = arith.constant 0 : index
    %c0_15 = arith.constant 0 : index
    %23 = vector.load %arg6[%c0_14, %c0_15] : memref<128x128xbf16, #tpu.memory_space<vmem>>, vector<128x128xbf16>
    %cst_16 = arith.constant dense<0.000000e+00> : vector<128x128xf32>
    %24 = tpu.matmul %22, %23, %cst_16 {dimension_numbers = #tpu.dot_dimension_numbers<[1], [0], [0], [1], [0, 0, 1, 1], [], []>} : vector<128x128xbf16>, vector<128x128xbf16>, vector<128x128xf32> -> vector<128x128xf32>
    %c0_17 = arith.constant 0 : index
    %c0_18 = arith.constant 0 : index
    %25 = vector.load %arg7[%c0_17, %c0_18] : memref<1x128xf32, #tpu.memory_space<vmem>>, vector<1x128xf32>
    %26 = vector.broadcast %25 : vector<1x128xf32> to vector<128x128xf32>
    %27 = arith.addf %24, %26 : vector<128x128xf32>
    %cst_19 = arith.constant 0.000000e+00 : f32
    %28 = vector.broadcast %cst_19 : f32 to vector<128x128xf32>
    %29 = arith.cmpf oge, %27, %28 : vector<128x128xf32>
    %cst_20 = arith.constant 0.00999999977 : f32
    %30 = vector.broadcast %cst_20 : f32 to vector<128x128xf32>
    %31 = arith.mulf %30, %27 : vector<128x128xf32>
    %32 = arith.select %29, %27, %31 : vector<128x128xi1>, vector<128x128xf32>
    %33 = arith.truncf %32 : vector<128x128xf32> to vector<128x128xbf16>
    %c0_21 = arith.constant 0 : index
    %c0_22 = arith.constant 0 : index
    %34 = vector.load %arg8[%c0_21, %c0_22] : memref<128x4xbf16, #tpu.memory_space<vmem>>, vector<128x4xbf16>
    %cst_23 = arith.constant dense<0.000000e+00> : vector<128x4xf32>
    %35 = tpu.matmul %33, %34, %cst_23 {dimension_numbers = #tpu.dot_dimension_numbers<[1], [0], [0], [1], [0, 0, 1, 1], [], []>} : vector<128x128xbf16>, vector<128x4xbf16>, vector<128x4xf32> -> vector<128x4xf32>
    %c0_24 = arith.constant 0 : index
    %c0_25 = arith.constant 0 : index
    %36 = vector.load %arg9[%c0_24, %c0_25] : memref<1x4xf32, #tpu.memory_space<vmem>>, vector<1x4xf32>
    %37 = vector.broadcast %36 : vector<1x4xf32> to vector<128x4xf32>
    %38 = arith.addf %35, %37 : vector<128x4xf32>
    %c0_26 = arith.constant 0 : index
    %c0_27 = arith.constant 0 : index
    %39 = vector.load %arg10[%c0_26, %c0_27] : memref<128x4xf32, #tpu.memory_space<vmem>>, vector<128x4xf32>
    tpu.vector_store %arg10[%c0_26, %c0_27], %38 {strides = array<i32>} : memref<128x4xf32, #tpu.memory_space<vmem>>, vector<128x4xf32>,
    return
  }
  func.func @transform_0(%arg0: i32) -> (i32, i32) {
    %c0_i32 = arith.constant 0 : i32
    %c0_i32_0 = arith.constant 0 : i32
    return %arg0, %c0_i32 : i32, i32
  }
  func.func @transform_1(%arg0: i32) -> (i32, i32) {
    %c0_i32 = arith.constant 0 : i32
    %c0_i32_0 = arith.constant 0 : i32
    %c0_i32_1 = arith.constant 0 : i32
    return %c0_i32, %c0_i32_0 : i32, i32
  }
  func.func @transform_2(%arg0: i32) -> (i32, i32) {
    %c0_i32 = arith.constant 0 : i32
    %c0_i32_0 = arith.constant 0 : i32
    %c0_i32_1 = arith.constant 0 : i32
    return %c0_i32, %c0_i32_0 : i32, i32
  }
  func.func @transform_3(%arg0: i32) -> (i32, i32) {
    %c0_i32 = arith.constant 0 : i32
    %c0_i32_0 = arith.constant 0 : i32
    %c0_i32_1 = arith.constant 0 : i32
    return %c0_i32, %c0_i32_0 : i32, i32
  }
  func.func @transform_4(%arg0: i32) -> (i32, i32) {
    %c0_i32 = arith.constant 0 : i32
    %c0_i32_0 = arith.constant 0 : i32
    %c0_i32_1 = arith.constant 0 : i32
    return %c0_i32, %c0_i32_0 : i32, i32
  }
  func.func @transform_5(%arg0: i32) -> (i32, i32) {
    %c0_i32 = arith.constant 0 : i32
    %c0_i32_0 = arith.constant 0 : i32
    %c0_i32_1 = arith.constant 0 : i32
    return %c0_i32, %c0_i32_0 : i32, i32
  }
  func.func @transform_6(%arg0: i32) -> (i32, i32) {
    %c0_i32 = arith.constant 0 : i32
    %c0_i32_0 = arith.constant 0 : i32
    %c0_i32_1 = arith.constant 0 : i32
    return %c0_i32, %c0_i32_0 : i32, i32
  }
  func.func @transform_7(%arg0: i32) -> (i32, i32) {
    %c0_i32 = arith.constant 0 : i32
    %c0_i32_0 = arith.constant 0 : i32
    %c0_i32_1 = arith.constant 0 : i32
    return %c0_i32, %c0_i32_0 : i32, i32
  }
  func.func @transform_8(%arg0: i32) -> (i32, i32) {
    %c0_i32 = arith.constant 0 : i32
    %c0_i32_0 = arith.constant 0 : i32
    %c0_i32_1 = arith.constant 0 : i32
    return %c0_i32, %c0_i32_0 : i32, i32
  }
  func.func @transform_9(%arg0: i32) -> (i32, i32) {
    %c0_i32 = arith.constant 0 : i32
    %c0_i32_0 = arith.constant 0 : i32
    return %arg0, %c0_i32 : i32, i32
  }
}

</mosaic_0001>

<llo_original>
// kernel: tpu_custom_call.1
$region0: #{tpu_custom_call.1}
  #allocation0 [shape = 'u32[]', space=smem, size = 0x4, offset = 0x4, fixed_abs, tag = 'smem constant byte address 0x4 - core index']
  #allocation1 [shape = 'u32[144,128]{1,0:T(1,128)}', space=vmem, size = 0x12000, scoped, tag = 'internal scratch']
  %s0 = inlined_call_operand.vmem [shape: bf16[128,96], index: 0, kind: input, shape index: {}]
  %s1 = inlined_call_operand.vmem [shape: bf16[96,128], index: 1, kind: input, shape index: {}]
  %s2 = inlined_call_operand.vmem [shape: f32[1,128], index: 2, kind: input, shape index: {}]
  %s3 = inlined_call_operand.vmem [shape: bf16[128,128], index: 3, kind: input, shape index: {}]
  %s4 = inlined_call_operand.vmem [shape: f32[1,128], index: 4, kind: input, shape index: {}]
  %s5 = inlined_call_operand.vmem [shape: bf16[128,128], index: 5, kind: input, shape index: {}]
  %s6 = inlined_call_operand.vmem [shape: f32[1,128], index: 6, kind: input, shape index: {}]
  %s7 = inlined_call_operand.vmem [shape: bf16[128,4], index: 7, kind: input, shape index: {}]
  %s8 = inlined_call_operand.vmem [shape: f32[1,4], index: 8, kind: input, shape index: {}]
  %s9 = inlined_call_operand.vmem [shape: f32[128,4], index: 9, kind: output, shape index: {}]
  %s10 = sld [smem:[#allocation0]]
  $region46: #{tpu_custom_call.1} parent=0
    _
  %s12 = ssub.s32 1, %s10
  %s13 = scalar_select 0, %s12, %s10
  // Predicated region
  $region2: #{tpu_custom_call.1} parent=0 // pred_check
    _
  $region3: #{tpu_custom_call.1} parent=0 // pred_check_branch
    %15 = sbr.rel (0) target = $region5
  $region4: #{tpu_custom_call.1} parent=0 // pred_region
    _
  $region5: #{tpu_custom_call.1} parent=0 // pred_fallthru
    _
  // Predicated region
  $region6: #{tpu_custom_call.1} parent=0 // pred_check
    _
  $region7: #{tpu_custom_call.1} parent=0 // pred_check_branch
    %17 = sbr.rel (0) target = $region9
  $region8: #{tpu_custom_call.1} parent=0 // pred_region
    _
  $region9: #{tpu_custom_call.1} parent=0 // pred_fallthru
    _
  // Predicated region
  $region10: #{tpu_custom_call.1} parent=0 // pred_check
    _
  $region11: #{tpu_custom_call.1} parent=0 // pred_check_branch
    %19 = sbr.rel (0) target = $region13
  $region12: #{tpu_custom_call.1} parent=0 // pred_region
    _
  $region13: #{tpu_custom_call.1} parent=0 // pred_fallthru
    _
  // Predicated region
  $region14: #{tpu_custom_call.1} parent=0 // pred_check
    _
  $region15: #{tpu_custom_call.1} parent=0 // pred_check_branch
    %21 = sbr.rel (0) target = $region17
  $region16: #{tpu_custom_call.1} parent=0 // pred_region
    _
  $region17: #{tpu_custom_call.1} parent=0 // pred_fallthru
    _
  // Predicated region
  $region18: #{tpu_custom_call.1} parent=0 // pred_check
    _
  $region19: #{tpu_custom_call.1} parent=0 // pred_check_branch
    %23 = sbr.rel (0) target = $region21
  $region20: #{tpu_custom_call.1} parent=0 // pred_region
    _
  $region21: #{tpu_custom_call.1} parent=0 // pred_fallthru
    _
  // Predicated region
  $region22: #{tpu_custom_call.1} parent=0 // pred_check
    _
  $region23: #{tpu_custom_call.1} parent=0 // pred_check_branch
    %25 = sbr.rel (0) target = $region25
  $region24: #{tpu_custom_call.1} parent=0 // pred_region
    _
  $region25: #{tpu_custom_call.1} parent=0 // pred_fallthru
    _
  // Predicated region
  $region26: #{tpu_custom_call.1} parent=0 // pred_check
    _
  $region27: #{tpu_custom_call.1} parent=0 // pred_check_branch
    %27 = sbr.rel (0) target = $region29
  $region28: #{tpu_custom_call.1} parent=0 // pred_region
    _
  $region29: #{tpu_custom_call.1} parent=0 // pred_fallthru
    _
  // Predicated region
  $region30: #{tpu_custom_call.1} parent=0 // pred_check
    _
  $region31: #{tpu_custom_call.1} parent=0 // pred_check_branch
    %29 = sbr.rel (0) target = $region33
  $region32: #{tpu_custom_call.1} parent=0 // pred_region
    _
  $region33: #{tpu_custom_call.1} parent=0 // pred_fallthru
    _
  // Predicated region
  $region34: #{tpu_custom_call.1} parent=0 // pred_check
    _
  $region35: #{tpu_custom_call.1} parent=0 // pred_check_branch
    %31 = sbr.rel (0) target = $region37
  $region36: #{tpu_custom_call.1} parent=0 // pred_region
    _
  $region37: #{tpu_custom_call.1} parent=0 // pred_fallthru
    _
  %v33 = vld [vmem:[%s0] sm:$0xf]
  %v34 = vld [vmem:[%s0 + $0x4] sm:$0xf]
  %v35 = vld [vmem:[%s0 + $0x8] sm:$0xf]
  %v36 = vld [vmem:[%s0 + $0xc] sm:$0xf]
  %v37 = vld [vmem:[%s0 + $0x10] sm:$0xf]
  %v38 = vld [vmem:[%s0 + $0x14] sm:$0xf]
  %v39 = vld [vmem:[%s0 + $0x18] sm:$0xf]
  %v40 = vld [vmem:[%s0 + $0x1c] sm:$0xf]
  %v41 = vld [vmem:[%s0 + $0x20] sm:$0xf]
  %v42 = vld [vmem:[%s0 + $0x24] sm:$0xf]
  %v43 = vld [vmem:[%s0 + $0x28] sm:$0xf]
  %v44 = vld [vmem:[%s0 + $0x2c] sm:$0xf]
  %v45 = vld [vmem:[%s0 + $0x30] sm:$0xf]
  %v46 = vld [vmem:[%s0 + $0x34] sm:$0xf]
  %v47 = vld [vmem:[%s0 + $0x38] sm:$0xf]
  %v48 = vld [vmem:[%s0 + $0x3c] sm:$0xf]
  %v49 = vld [vmem:[%s1] sm:$0xf]
  %v50 = vld [vmem:[%s1 + $0x4] sm:$0xf]
  %v51 = vld [vmem:[%s1 + $0x8] sm:$0xf]
  %v52 = vld [vmem:[%s1 + $0xc] sm:$0xf]
  %v53 = vld [vmem:[%s1 + $0x10] sm:$0xf]
  %v54 = vld [vmem:[%s1 + $0x14] sm:$0xf]
  %v55 = vld [vmem:[%s1 + $0x18] sm:$0xf]
  %v56 = vld [vmem:[%s1 + $0x1c] sm:$0xf]
  %v57 = vld [vmem:[%s1 + $0x20] sm:$0xf]
  %v58 = vld [vmem:[%s1 + $0x24] sm:$0xf]
  %v59 = vld [vmem:[%s1 + $0x28] sm:$0xf]
  %v60 = vld [vmem:[%s1 + $0x2c] sm:$0xf]
  %v61 = vld [vmem:[%s2] sm:$0x1]
  %v63 = vlaneseq
  %v64 = vshrl.u32 %v63, 7
  %v65 = vsub.s32 0, %v64
  %v66 = vrot.slane %v61, %v65
  %v84 = vunpack.c.l.b16 %v33
  %v85 = vunpack.c.l.b16 %v34
  %v86 = vunpack.c.l.b16 %v35
  %v87 = vunpack.c.l.b16 %v36
  %v88 = vunpack.c.l.b16 %v37
  %v89 = vunpack.c.l.b16 %v38
  %v90 = vunpack.c.l.b16 %v39
  %v91 = vunpack.c.l.b16 %v40
  %v92 = vunpack.c.l.b16 %v41
  %v93 = vunpack.c.l.b16 %v42
  %v94 = vunpack.c.l.b16 %v43
  %v95 = vunpack.c.l.b16 %v44
  %v96 = vunpack.c.l.b16 %v45
  %v97 = vunpack.c.l.b16 %v46
  %v98 = vunpack.c.l.b16 %v47
  %v99 = vunpack.c.l.b16 %v48
  %v100 = vpack.c.b16 %v85, %v84
  %v101 = vpack.c.b16 %v87, %v86
  %v102 = vpack.c.b16 %v89, %v88
  %v103 = vpack.c.b16 %v91, %v90
  %v104 = vpack.c.b16 %v93, %v92
  %v105 = vpack.c.b16 %v95, %v94
  %v106 = vpack.c.b16 %v97, %v96
  %v107 = vpack.c.b16 %v99, %v98
  %v120 = vunpack.c.l.b16 %v49
  %v121 = vunpack.c.l.b16 %v50
  %v122 = vunpack.c.l.b16 %v51
  %v123 = vunpack.c.l.b16 %v52
  %v124 = vunpack.c.l.b16 %v53
  %v125 = vunpack.c.l.b16 %v54
  %v126 = vunpack.c.l.b16 %v55
  %v127 = vunpack.c.l.b16 %v56
  %v128 = vunpack.c.l.b16 %v57
  %v129 = vunpack.c.l.b16 %v58
  %v130 = vunpack.c.l.b16 %v59
  %v131 = vunpack.c.l.b16 %v60
  %v132 = vpack.c.b16 %v121, %v120
  %v133 = vpack.c.b16 %v123, %v122
  %v134 = vpack.c.b16 %v125, %v124
  %v135 = vpack.c.b16 %v127, %v126
  %v136 = vpack.c.b16 %v129, %v128
  %v137 = vpack.c.b16 %v131, %v130
  %vm144 = vcmask 785408
  %v146 = vsel %vm144, %v100, 0
  %v149 = vsel %vm144, %v101, 0
  %v152 = vsel %vm144, %v102, 0
  %v155 = vsel %vm144, %v103, 0
  %v158 = vsel %vm144, %v104, 0
  %v161 = vsel %vm144, %v105, 0
  %v164 = vsel %vm144, %v106, 0
  %v167 = vsel %vm144, %v107, 0
  %169 = vmatprep.subr.bf16.mxu0 0
  %170 = vmatpush1.bf16.msra.mxu0 %v132
  %171 = vmatprep.subr.bf16.mxu0 0
  %172 = vmatpush1.bf16.msra.mxu0 %v133
  %173 = vmatprep.subr.bf16.mxu0 0
  %174 = vmatpush1.bf16.msra.mxu0 %v134
  %175 = vmatprep.subr.bf16.mxu0 0
  %176 = vmatpush1.bf16.msra.mxu0 %v135
  %177 = vmatprep.subr.bf16.mxu0 0
  %178 = vmatpush1.bf16.msra.mxu0 %v136
  %179 = vmatprep.subr.bf16.mxu0 0
  %180 = vmatpush1.bf16.msra.mxu0 %v137
  %181 = vmatprep.subr.bf16.mxu0 0
  %182 = vmatpush1.bf16.msra.mxu0 0
  %183 = vmatprep.subr.bf16.mxu0 0
  %184 = vmatpush1.bf16.msra.mxu0 0
  %185 = vmatprep.subr.bf16.mxu0 0
  %186 = vmatpush1.bf16.msra.mxu0 0
  %187 = vmatprep.subr.bf16.mxu0 0
  %188 = vmatpush1.bf16.msra.mxu0 0
  %189 = vmatprep.subr.bf16.mxu0 0
  %190 = vmatpush1.bf16.msra.mxu0 0
  %191 = vmatprep.subr.bf16.mxu0 0
  %192 = vmatpush1.bf16.msra.mxu0 0
  %193 = vmatprep.subr.bf16.mxu0 0
  %194 = vmatpush1.bf16.msra.mxu0 0
  %195 = vmatprep.subr.bf16.mxu0 0
  %196 = vmatpush1.bf16.msra.mxu0 0
  %197 = vmatprep.subr.bf16.mxu0 0
  %198 = vmatpush1.bf16.msra.mxu0 0
  %199 = vmatprep.subr.bf16.mxu0 0
  %200 = vmatpush1.bf16.msra.mxu0 0
  %201 = vmatprep.mubr.bf16.mxu0 0
  %202 = vmatmul.mubr.bf16.gmra.mrb[0].mxu0 %v146
  %v203 = vpop.f32.mrb[0].mxu0
  %v204 = vadd.f32 %v66, %v203
  %v205 = vpop.f32.mrb[0].mxu0
  %v206 = vpop.f32.mrb[0].mxu0
  %v207 = vadd.f32 %v66, %v206
  %v208 = vpop.f32.mrb[0].mxu0
  %209 = vmatprep.mubr.bf16.mxu0 0
  %210 = vmatmul.mubr.bf16.gmra.mrb[0].mxu0 %v149
  %v211 = vpop.f32.mrb[0].mxu0
  %v212 = vadd.f32 %v66, %v211
  %v213 = vpop.f32.mrb[0].mxu0
  %v214 = vpop.f32.mrb[0].mxu0
  %v215 = vadd.f32 %v66, %v214
  %v216 = vpop.f32.mrb[0].mxu0
  %217 = vmatprep.mubr.bf16.mxu0 0
  %218 = vmatmul.mubr.bf16.gmra.mrb[0].mxu0 %v152
  %v219 = vpop.f32.mrb[0].mxu0
  %v220 = vadd.f32 %v66, %v219
  %v221 = vpop.f32.mrb[0].mxu0
  %v222 = vpop.f32.mrb[0].mxu0
  %v223 = vadd.f32 %v66, %v222
  %v224 = vpop.f32.mrb[0].mxu0
  %225 = vmatprep.mubr.bf16.mxu0 0
  %226 = vmatmul.mubr.bf16.gmra.mrb[0].mxu0 %v155
  %v227 = vpop.f32.mrb[0].mxu0
  %v228 = vadd.f32 %v66, %v227
  %v229 = vpop.f32.mrb[0].mxu0
  %v230 = vpop.f32.mrb[0].mxu0
  %v231 = vadd.f32 %v66, %v230
  %v232 = vpop.f32.mrb[0].mxu0
  %233 = vmatprep.mubr.bf16.mxu0 0
  %234 = vmatmul.mubr.bf16.gmra.mrb[0].mxu0 %v158
  %v235 = vpop.f32.mrb[0].mxu0
  %v236 = vadd.f32 %v66, %v235
  %v237 = vpop.f32.mrb[0].mxu0
  %v238 = vpop.f32.mrb[0].mxu0
  %v239 = vadd.f32 %v66, %v238
  %v240 = vpop.f32.mrb[0].mxu0
  %241 = vmatprep.mubr.bf16.mxu0 0
  %242 = vmatmul.mubr.bf16.gmra.mrb[0].mxu0 %v161
  %v243 = vpop.f32.mrb[0].mxu0
  %v244 = vadd.f32 %v66, %v243
  %v245 = vpop.f32.mrb[0].mxu0
  %v246 = vpop.f32.mrb[0].mxu0
  %v247 = vadd.f32 %v66, %v246
  %v248 = vpop.f32.mrb[0].mxu0
  %249 = vmatprep.mubr.bf16.mxu0 0
  %250 = vmatmul.mubr.bf16.gmra.mrb[0].mxu0 %v164
  %v251 = vpop.f32.mrb[0].mxu0
  %v252 = vadd.f32 %v66, %v251
  %v253 = vpop.f32.mrb[0].mxu0
  %v254 = vpop.f32.mrb[0].mxu0
  %v255 = vadd.f32 %v66, %v254
  %v256 = vpop.f32.mrb[0].mxu0
  %257 = vmatprep.mubr.bf16.mxu0 0
  %258 = vmatmul.mubr.bf16.gmra.mrb[0].mxu0 %v167
  %v259 = vpop.f32.mrb[0].mxu0
  %v260 = vadd.f32 %v66, %v259
  %v261 = vpop.f32.mrb[0].mxu0
  %v262 = vpop.f32.mrb[0].mxu0
  %v263 = vadd.f32 %v66, %v262
  %v264 = vpop.f32.mrb[0].mxu0
  %265 = vdwg.mxu0
  %vm266 = vcmp.ge.f32.partialorder %v204, 0.0
  %vm267 = vcmp.ge.f32.partialorder %v207, 0.0
  %vm268 = vcmp.ge.f32.partialorder %v212, 0.0
  %vm269 = vcmp.ge.f32.partialorder %v215, 0.0
  %vm270 = vcmp.ge.f32.partialorder %v220, 0.0
  %vm271 = vcmp.ge.f32.partialorder %v223, 0.0
  %vm272 = vcmp.ge.f32.partialorder %v228, 0.0
  %vm273 = vcmp.ge.f32.partialorder %v231, 0.0
  %vm274 = vcmp.ge.f32.partialorder %v236, 0.0
  %vm275 = vcmp.ge.f32.partialorder %v239, 0.0
  %vm276 = vcmp.ge.f32.partialorder %v244, 0.0
  %vm277 = vcmp.ge.f32.partialorder %v247, 0.0
  %vm278 = vcmp.ge.f32.partialorder %v252, 0.0
  %vm279 = vcmp.ge.f32.partialorder %v255, 0.0
  %vm280 = vcmp.ge.f32.partialorder %v260, 0.0
  %vm281 = vcmp.ge.f32.partialorder %v263, 0.0
  %v282 = vmul.f32 %v204, 0.01
  %v283 = vmul.f32 %v207, 0.01
  %v284 = vmul.f32 %v212, 0.01
  %v285 = vmul.f32 %v215, 0.01
  %v286 = vmul.f32 %v220, 0.01
  %v287 = vmul.f32 %v223, 0.01
  %v288 = vmul.f32 %v228, 0.01
  %v289 = vmul.f32 %v231, 0.01
  %v290 = vmul.f32 %v236, 0.01
  %v291 = vmul.f32 %v239, 0.01
  %v292 = vmul.f32 %v244, 0.01
  %v293 = vmul.f32 %v247, 0.01
  %v294 = vmul.f32 %v252, 0.01
  %v295 = vmul.f32 %v255, 0.01
  %v296 = vmul.f32 %v260, 0.01
  %v297 = vmul.f32 %v263, 0.01
  %v298 = vsel %vm266, %v204, %v282
  %v299 = vsel %vm267, %v207, %v283
  %v300 = vsel %vm268, %v212, %v284
  %v301 = vsel %vm269, %v215, %v285
  %v302 = vsel %vm270, %v220, %v286
  %v303 = vsel %vm271, %v223, %v287
  %v304 = vsel %vm272, %v228, %v288
  %v305 = vsel %vm273, %v231, %v289
  %v306 = vsel %vm274, %v236, %v290
  %v307 = vsel %vm275, %v239, %v291
  %v308 = vsel %vm276, %v244, %v292
  %v309 = vsel %vm277, %v247, %v293
  %v310 = vsel %vm278, %v252, %v294
  %v311 = vsel %vm279, %v255, %v295
  %v312 = vsel %vm280, %v260, %v296
  %v313 = vsel %vm281, %v263, %v297
  %v314 = vpack.c.bf16 %v299, %v298
  %v315 = vpack.c.bf16 %v301, %v300
  %v316 = vpack.c.bf16 %v303, %v302
  %v317 = vpack.c.bf16 %v305, %v304
  %v318 = vpack.c.bf16 %v307, %v306
  %v319 = vpack.c.bf16 %v309, %v308
  %v320 = vpack.c.bf16 %v311, %v310
  %v321 = vpack.c.bf16 %v313, %v312
  %v322 = vld [vmem:[%s3] sm:$0xf]
  %v323 = vld [vmem:[%s3 + $0x4] sm:$0xf]
  %v324 = vld [vmem:[%s3 + $0x8] sm:$0xf]
  %v325 = vld [vmem:[%s3 + $0xc] sm:$0xf]
  %v326 = vld [vmem:[%s3 + $0x10] sm:$0xf]
  %v327 = vld [vmem:[%s3 + $0x14] sm:$0xf]
  %v328 = vld [vmem:[%s3 + $0x18] sm:$0xf]
  %v329 = vld [vmem:[%s3 + $0x1c] sm:$0xf]
  %v330 = vld [vmem:[%s3 + $0x20] sm:$0xf]
  %v331 = vld [vmem:[%s3 + $0x24] sm:$0xf]
  %v332 = vld [vmem:[%s3 + $0x28] sm:$0xf]
  %v333 = vld [vmem:[%s3 + $0x2c] sm:$0xf]
  %v334 = vld [vmem:[%s3 + $0x30] sm:$0xf]
  %v335 = vld [vmem:[%s3 + $0x34] sm:$0xf]
  %v336 = vld [vmem:[%s3 + $0x38] sm:$0xf]
  %v337 = vld [vmem:[%s3 + $0x3c] sm:$0xf]
  %v338 = vld [vmem:[%s4] sm:$0x1]
  %v340 = vlaneseq
  %v341 = vshrl.u32 %v340, 7
  %v342 = vsub.s32 0, %v341
  %v343 = vrot.slane %v338, %v342
  %v361 = vunpack.c.l.b16 %v322
  %v362 = vunpack.c.l.b16 %v323
  %v363 = vunpack.c.l.b16 %v324
  %v364 = vunpack.c.l.b16 %v325
  %v365 = vunpack.c.l.b16 %v326
  %v366 = vunpack.c.l.b16 %v327
  %v367 = vunpack.c.l.b16 %v328
  %v368 = vunpack.c.l.b16 %v329
  %v369 = vunpack.c.l.b16 %v330
  %v370 = vunpack.c.l.b16 %v331
  %v371 = vunpack.c.l.b16 %v332
  %v372 = vunpack.c.l.b16 %v333
  %v373 = vunpack.c.l.b16 %v334
  %v374 = vunpack.c.l.b16 %v335
  %v375 = vunpack.c.l.b16 %v336
  %v376 = vunpack.c.l.b16 %v337
  %v377 = vpack.c.b16 %v362, %v361
  %v378 = vpack.c.b16 %v364, %v363
  %v379 = vpack.c.b16 %v366, %v365
  %v380 = vpack.c.b16 %v368, %v367
  %v381 = vpack.c.b16 %v370, %v369
  %v382 = vpack.c.b16 %v372, %v371
  %v383 = vpack.c.b16 %v374, %v373
  %v384 = vpack.c.b16 %v376, %v375
  %393 = vmatprep.subr.bf16.mxu0 0
  %394 = vmatpush1.bf16.msra.mxu0 %v377
  %395 = vmatprep.subr.bf16.mxu0 0
  %396 = vmatpush1.bf16.msra.mxu0 %v378
  %397 = vmatprep.subr.bf16.mxu0 0
  %398 = vmatpush1.bf16.msra.mxu0 %v379
  %399 = vmatprep.subr.bf16.mxu0 0
  %400 = vmatpush1.bf16.msra.mxu0 %v380
  %401 = vmatprep.subr.bf16.mxu0 0
  %402 = vmatpush1.bf16.msra.mxu0 %v381
  %403 = vmatprep.subr.bf16.mxu0 0
  %404 = vmatpush1.bf16.msra.mxu0 %v382
  %405 = vmatprep.subr.bf16.mxu0 0
  %406 = vmatpush1.bf16.msra.mxu0 %v383
  %407 = vmatprep.subr.bf16.mxu0 0
  %408 = vmatpush1.bf16.msra.mxu0 %v384
  %409 = vmatprep.subr.bf16.mxu0 0
  %410 = vmatpush1.bf16.msra.mxu0 0
  %411 = vmatprep.subr.bf16.mxu0 0
  %412 = vmatpush1.bf16.msra.mxu0 0
  %413 = vmatprep.subr.bf16.mxu0 0
  %414 = vmatpush1.bf16.msra.mxu0 0
  %415 = vmatprep.subr.bf16.mxu0 0
  %416 = vmatpush1.bf16.msra.mxu0 0
  %417 = vmatprep.subr.bf16.mxu0 0
  %418 = vmatpush1.bf16.msra.mxu0 0
  %419 = vmatprep.subr.bf16.mxu0 0
  %420 = vmatpush1.bf16.msra.mxu0 0
  %421 = vmatprep.subr.bf16.mxu0 0
  %422 = vmatpush1.bf16.msra.mxu0 0
  %423 = vmatprep.subr.bf16.mxu0 0
  %424 = vmatpush1.bf16.msra.mxu0 0
  %425 = vmatprep.mubr.bf16.mxu0 0
  %426 = vmatmul.mubr.bf16.gmra.mrb[0].mxu0 %v314
  %v427 = vpop.f32.mrb[0].mxu0
  %v428 = vadd.f32 %v343, %v427
  %v429 = vpop.f32.mrb[0].mxu0
  %v430 = vpop.f32.mrb[0].mxu0
  %v431 = vadd.f32 %v343, %v430
  %v432 = vpop.f32.mrb[0].mxu0
  %433 = vmatprep.mubr.bf16.mxu0 0
  %434 = vmatmul.mubr.bf16.gmra.mrb[0].mxu0 %v315
  %v435 = vpop.f32.mrb[0].mxu0
  %v436 = vadd.f32 %v343, %v435
  %v437 = vpop.f32.mrb[0].mxu0
  %v438 = vpop.f32.mrb[0].mxu0
  %v439 = vadd.f32 %v343, %v438
  %v440 = vpop.f32.mrb[0].mxu0
  %441 = vmatprep.mubr.bf16.mxu0 0
  %442 = vmatmul.mubr.bf16.gmra.mrb[0].mxu0 %v316
  %v443 = vpop.f32.mrb[0].mxu0
  %v444 = vadd.f32 %v343, %v443
  %v445 = vpop.f32.mrb[0].mxu0
  %v446 = vpop.f32.mrb[0].mxu0
  %v447 = vadd.f32 %v343, %v446
  %v448 = vpop.f32.mrb[0].mxu0
  %449 = vmatprep.mubr.bf16.mxu0 0
  %450 = vmatmul.mubr.bf16.gmra.mrb[0].mxu0 %v317
  %v451 = vpop.f32.mrb[0].mxu0
  %v452 = vadd.f32 %v343, %v451
  %v453 = vpop.f32.mrb[0].mxu0
  %v454 = vpop.f32.mrb[0].mxu0
  %v455 = vadd.f32 %v343, %v454
  %v456 = vpop.f32.mrb[0].mxu0
  %457 = vmatprep.mubr.bf16.mxu0 0
  %458 = vmatmul.mubr.bf16.gmra.mrb[0].mxu0 %v318
  %v459 = vpop.f32.mrb[0].mxu0
  %v460 = vadd.f32 %v343, %v459
  %v461 = vpop.f32.mrb[0].mxu0
  %v462 = vpop.f32.mrb[0].mxu0
  %v463 = vadd.f32 %v343, %v462
  %v464 = vpop.f32.mrb[0].mxu0
  %465 = vmatprep.mubr.bf16.mxu0 0
  %466 = vmatmul.mubr.bf16.gmra.mrb[0].mxu0 %v319
  %v467 = vpop.f32.mrb[0].mxu0
  %v468 = vadd.f32 %v343, %v467
  %v469 = vpop.f32.mrb[0].mxu0
  %v470 = vpop.f32.mrb[0].mxu0
  %v471 = vadd.f32 %v343, %v470
  %v472 = vpop.f32.mrb[0].mxu0
  %473 = vmatprep.mubr.bf16.mxu0 0
  %474 = vmatmul.mubr.bf16.gmra.mrb[0].mxu0 %v320
  %v475 = vpop.f32.mrb[0].mxu0
  %v476 = vadd.f32 %v343, %v475
  %v477 = vpop.f32.mrb[0].mxu0
  %v478 = vpop.f32.mrb[0].mxu0
  %v479 = vadd.f32 %v343, %v478
  %v480 = vpop.f32.mrb[0].mxu0
  %481 = vmatprep.mubr.bf16.mxu0 0
  %482 = vmatmul.mubr.bf16.gmra.mrb[0].mxu0 %v321
  %v483 = vpop.f32.mrb[0].mxu0
  %v484 = vadd.f32 %v343, %v483
  %v485 = vpop.f32.mrb[0].mxu0
  %v486 = vpop.f32.mrb[0].mxu0
  %v487 = vadd.f32 %v343, %v486
  %v488 = vpop.f32.mrb[0].mxu0
  %489 = vdwg.mxu0
  %vm490 = vcmp.ge.f32.partialorder %v428, 0.0
  %vm491 = vcmp.ge.f32.partialorder %v431, 0.0
  %vm492 = vcmp.ge.f32.partialorder %v436, 0.0
  %vm493 = vcmp.ge.f32.partialorder %v439, 0.0
  %vm494 = vcmp.ge.f32.partialorder %v444, 0.0
  %vm495 = vcmp.ge.f32.partialorder %v447, 0.0
  %vm496 = vcmp.ge.f32.partialorder %v452, 0.0
  %vm497 = vcmp.ge.f32.partialorder %v455, 0.0
  %vm498 = vcmp.ge.f32.partialorder %v460, 0.0
  %vm499 = vcmp.ge.f32.partialorder %v463, 0.0
  %vm500 = vcmp.ge.f32.partialorder %v468, 0.0
  %vm501 = vcmp.ge.f32.partialorder %v471, 0.0
  %vm502 = vcmp.ge.f32.partialorder %v476, 0.0
  %vm503 = vcmp.ge.f32.partialorder %v479, 0.0
  %vm504 = vcmp.ge.f32.partialorder %v484, 0.0
  %vm505 = vcmp.ge.f32.partialorder %v487, 0.0
  %v506 = vmul.f32 %v428, 0.01
  %v507 = vmul.f32 %v431, 0.01
  %v508 = vmul.f32 %v436, 0.01
  %v509 = vmul.f32 %v439, 0.01
  %v510 = vmul.f32 %v444, 0.01
  %v511 = vmul.f32 %v447, 0.01
  %v512 = vmul.f32 %v452, 0.01
  %v513 = vmul.f32 %v455, 0.01
  %v514 = vmul.f32 %v460, 0.01
  %v515 = vmul.f32 %v463, 0.01
  %v516 = vmul.f32 %v468, 0.01
  %v517 = vmul.f32 %v471, 0.01
  %v518 = vmul.f32 %v476, 0.01
  %v519 = vmul.f32 %v479, 0.01
  %v520 = vmul.f32 %v484, 0.01
  %v521 = vmul.f32 %v487, 0.01
  %v522 = vsel %vm490, %v428, %v506
  %v523 = vsel %vm491, %v431, %v507
  %v524 = vsel %vm492, %v436, %v508
  %v525 = vsel %vm493, %v439, %v509
  %v526 = vsel %vm494, %v444, %v510
  %v527 = vsel %vm495, %v447, %v511
  %v528 = vsel %vm496, %v452, %v512
  %v529 = vsel %vm497, %v455, %v513
  %v530 = vsel %vm498, %v460, %v514
  %v531 = vsel %vm499, %v463, %v515
  %v532 = vsel %vm500, %v468, %v516
  %v533 = vsel %vm501, %v471, %v517
  %v534 = vsel %vm502, %v476, %v518
  %v535 = vsel %vm503, %v479, %v519
  %v536 = vsel %vm504, %v484, %v520
  %v537 = vsel %vm505, %v487, %v521
  %v538 = vpack.c.bf16 %v523, %v522
  %v539 = vpack.c.bf16 %v525, %v524
  %v540 = vpack.c.bf16 %v527, %v526
  %v541 = vpack.c.bf16 %v529, %v528
  %v542 = vpack.c.bf16 %v531, %v530
  %v543 = vpack.c.bf16 %v533, %v532
  %v544 = vpack.c.bf16 %v535, %v534
  %v545 = vpack.c.bf16 %v537, %v536
  %v546 = vld [vmem:[%s5] sm:$0xf]
  %v547 = vld [vmem:[%s5 + $0x4] sm:$0xf]
  %v548 = vld [vmem:[%s5 + $0x8] sm:$0xf]
  %v549 = vld [vmem:[%s5 + $0xc] sm:$0xf]
  %v550 = vld [vmem:[%s5 + $0x10] sm:$0xf]
  %v551 = vld [vmem:[%s5 + $0x14] sm:$0xf]
  %v552 = vld [vmem:[%s5 + $0x18] sm:$0xf]
  %v553 = vld [vmem:[%s5 + $0x1c] sm:$0xf]
  %v554 = vld [vmem:[%s5 + $0x20] sm:$0xf]
  %v555 = vld [vmem:[%s5 + $0x24] sm:$0xf]
  %v556 = vld [vmem:[%s5 + $0x28] sm:$0xf]
  %v557 = vld [vmem:[%s5 + $0x2c] sm:$0xf]
  %v558 = vld [vmem:[%s5 + $0x30] sm:$0xf]
  %v559 = vld [vmem:[%s5 + $0x34] sm:$0xf]
  %v560 = vld [vmem:[%s5 + $0x38] sm:$0xf]
  %v561 = vld [vmem:[%s5 + $0x3c] sm:$0xf]
  %v562 = vld [vmem:[%s6] sm:$0x1]
  %v564 = vlaneseq
  %v565 = vshrl.u32 %v564, 7
  %v566 = vsub.s32 0, %v565
  %v567 = vrot.slane %v562, %v566
  %v585 = vunpack.c.l.b16 %v546
  %v586 = vunpack.c.l.b16 %v547
  %v587 = vunpack.c.l.b16 %v548
  %v588 = vunpack.c.l.b16 %v549
  %v589 = vunpack.c.l.b16 %v550
  %v590 = vunpack.c.l.b16 %v551
  %v591 = vunpack.c.l.b16 %v552
  %v592 = vunpack.c.l.b16 %v553
  %v593 = vunpack.c.l.b16 %v554
  %v594 = vunpack.c.l.b16 %v555
  %v595 = vunpack.c.l.b16 %v556
  %v596 = vunpack.c.l.b16 %v557
  %v597 = vunpack.c.l.b16 %v558
  %v598 = vunpack.c.l.b16 %v559
  %v599 = vunpack.c.l.b16 %v560
  %v600 = vunpack.c.l.b16 %v561
  %v601 = vpack.c.b16 %v586, %v585
  %v602 = vpack.c.b16 %v588, %v587
  %v603 = vpack.c.b16 %v590, %v589
  %v604 = vpack.c.b16 %v592, %v591
  %v605 = vpack.c.b16 %v594, %v593
  %v606 = vpack.c.b16 %v596, %v595
  %v607 = vpack.c.b16 %v598, %v597
  %v608 = vpack.c.b16 %v600, %v599
  %617 = vmatprep.subr.bf16.mxu0 0
  %618 = vmatpush1.bf16.msra.mxu0 %v601
  %619 = vmatprep.subr.bf16.mxu0 0
  %620 = vmatpush1.bf16.msra.mxu0 %v602
  %621 = vmatprep.subr.bf16.mxu0 0
  %622 = vmatpush1.bf16.msra.mxu0 %v603
  %623 = vmatprep.subr.bf16.mxu0 0
  %624 = vmatpush1.bf16.msra.mxu0 %v604
  %625 = vmatprep.subr.bf16.mxu0 0
  %626 = vmatpush1.bf16.msra.mxu0 %v605
  %627 = vmatprep.subr.bf16.mxu0 0
  %628 = vmatpush1.bf16.msra.mxu0 %v606
  %629 = vmatprep.subr.bf16.mxu0 0
  %630 = vmatpush1.bf16.msra.mxu0 %v607
  %631 = vmatprep.subr.bf16.mxu0 0
  %632 = vmatpush1.bf16.msra.mxu0 %v608
  %633 = vmatprep.subr.bf16.mxu0 0
  %634 = vmatpush1.bf16.msra.mxu0 0
  %635 = vmatprep.subr.bf16.mxu0 0
  %636 = vmatpush1.bf16.msra.mxu0 0
  %637 = vmatprep.subr.bf16.mxu0 0
  %638 = vmatpush1.bf16.msra.mxu0 0
  %639 = vmatprep.subr.bf16.mxu0 0
  %640 = vmatpush1.bf16.msra.mxu0 0
  %641 = vmatprep.subr.bf16.mxu0 0
  %642 = vmatpush1.bf16.msra.mxu0 0
  %643 = vmatprep.subr.bf16.mxu0 0
  %644 = vmatpush1.bf16.msra.mxu0 0
  %645 = vmatprep.subr.bf16.mxu0 0
  %646 = vmatpush1.bf16.msra.mxu0 0
  %647 = vmatprep.subr.bf16.mxu0 0
  %648 = vmatpush1.bf16.msra.mxu0 0
  %649 = vmatprep.mubr.bf16.mxu0 0
  %650 = vmatmul.mubr.bf16.gmra.mrb[0].mxu0 %v538
  %v651 = vpop.f32.mrb[0].mxu0
  %v652 = vadd.f32 %v567, %v651
  %v653 = vpop.f32.mrb[0].mxu0
  %v654 = vpop.f32.mrb[0].mxu0
  %v655 = vadd.f32 %v567, %v654
  %v656 = vpop.f32.mrb[0].mxu0
  %657 = vmatprep.mubr.bf16.mxu0 0
  %658 = vmatmul.mubr.bf16.gmra.mrb[0].mxu0 %v539
  %v659 = vpop.f32.mrb[0].mxu0
  %v660 = vadd.f32 %v567, %v659
  %v661 = vpop.f32.mrb[0].mxu0
  %v662 = vpop.f32.mrb[0].mxu0
  %v663 = vadd.f32 %v567, %v662
  %v664 = vpop.f32.mrb[0].mxu0
  %665 = vmatprep.mubr.bf16.mxu0 0
  %666 = vmatmul.mubr.bf16.gmra.mrb[0].mxu0 %v540
  %v667 = vpop.f32.mrb[0].mxu0
  %v668 = vadd.f32 %v567, %v667
  %v669 = vpop.f32.mrb[0].mxu0
  %v670 = vpop.f32.mrb[0].mxu0
  %v671 = vadd.f32 %v567, %v670
  %v672 = vpop.f32.mrb[0].mxu0
  %673 = vmatprep.mubr.bf16.mxu0 0
  %674 = vmatmul.mubr.bf16.gmra.mrb[0].mxu0 %v541
  %v675 = vpop.f32.mrb[0].mxu0
  %v676 = vadd.f32 %v567, %v675
  %v677 = vpop.f32.mrb[0].mxu0
  %v678 = vpop.f32.mrb[0].mxu0
  %v679 = vadd.f32 %v567, %v678
  %v680 = vpop.f32.mrb[0].mxu0
  %681 = vmatprep.mubr.bf16.mxu0 0
  %682 = vmatmul.mubr.bf16.gmra.mrb[0].mxu0 %v542
  %v683 = vpop.f32.mrb[0].mxu0
  %v684 = vadd.f32 %v567, %v683
  %v685 = vpop.f32.mrb[0].mxu0
  %v686 = vpop.f32.mrb[0].mxu0
  %v687 = vadd.f32 %v567, %v686
  %v688 = vpop.f32.mrb[0].mxu0
  %689 = vmatprep.mubr.bf16.mxu0 0
  %690 = vmatmul.mubr.bf16.gmra.mrb[0].mxu0 %v543
  %v691 = vpop.f32.mrb[0].mxu0
  %v692 = vadd.f32 %v567, %v691
  %v693 = vpop.f32.mrb[0].mxu0
  %v694 = vpop.f32.mrb[0].mxu0
  %v695 = vadd.f32 %v567, %v694
  %v696 = vpop.f32.mrb[0].mxu0
  %697 = vmatprep.mubr.bf16.mxu0 0
  %698 = vmatmul.mubr.bf16.gmra.mrb[0].mxu0 %v544
  %v699 = vpop.f32.mrb[0].mxu0
  %v700 = vadd.f32 %v567, %v699
  %v701 = vpop.f32.mrb[0].mxu0
  %v702 = vpop.f32.mrb[0].mxu0
  %v703 = vadd.f32 %v567, %v702
  %v704 = vpop.f32.mrb[0].mxu0
  %705 = vmatprep.mubr.bf16.mxu0 0
  %706 = vmatmul.mubr.bf16.gmra.mrb[0].mxu0 %v545
  %v707 = vpop.f32.mrb[0].mxu0
  %v708 = vadd.f32 %v567, %v707
  %v709 = vpop.f32.mrb[0].mxu0
  %v710 = vpop.f32.mrb[0].mxu0
  %v711 = vadd.f32 %v567, %v710
  %v712 = vpop.f32.mrb[0].mxu0
  %713 = vdwg.mxu0
  %vm714 = vcmp.ge.f32.partialorder %v652, 0.0
  %vm715 = vcmp.ge.f32.partialorder %v655, 0.0
  %vm716 = vcmp.ge.f32.partialorder %v660, 0.0
  %vm717 = vcmp.ge.f32.partialorder %v663, 0.0
  %vm718 = vcmp.ge.f32.partialorder %v668, 0.0
  %vm719 = vcmp.ge.f32.partialorder %v671, 0.0
  %vm720 = vcmp.ge.f32.partialorder %v676, 0.0
  %vm721 = vcmp.ge.f32.partialorder %v679, 0.0
  %vm722 = vcmp.ge.f32.partialorder %v684, 0.0
  %vm723 = vcmp.ge.f32.partialorder %v687, 0.0
  %vm724 = vcmp.ge.f32.partialorder %v692, 0.0
  %vm725 = vcmp.ge.f32.partialorder %v695, 0.0
  %vm726 = vcmp.ge.f32.partialorder %v700, 0.0
  %vm727 = vcmp.ge.f32.partialorder %v703, 0.0
  %vm728 = vcmp.ge.f32.partialorder %v708, 0.0
  %vm729 = vcmp.ge.f32.partialorder %v711, 0.0
  %v730 = vmul.f32 %v652, 0.01
  %v731 = vmul.f32 %v655, 0.01
  %v732 = vmul.f32 %v660, 0.01
  %v733 = vmul.f32 %v663, 0.01
  %v734 = vmul.f32 %v668, 0.01
  %v735 = vmul.f32 %v671, 0.01
  %v736 = vmul.f32 %v676, 0.01
  %v737 = vmul.f32 %v679, 0.01
  %v738 = vmul.f32 %v684, 0.01
  %v739 = vmul.f32 %v687, 0.01
  %v740 = vmul.f32 %v692, 0.01
  %v741 = vmul.f32 %v695, 0.01
  %v742 = vmul.f32 %v700, 0.01
  %v743 = vmul.f32 %v703, 0.01
  %v744 = vmul.f32 %v708, 0.01
  %v745 = vmul.f32 %v711, 0.01
  %v746 = vsel %vm714, %v652, %v730
  %v747 = vsel %vm715, %v655, %v731
  %v748 = vsel %vm716, %v660, %v732
  %v749 = vsel %vm717, %v663, %v733
  %v750 = vsel %vm718, %v668, %v734
  %v751 = vsel %vm719, %v671, %v735
  %v752 = vsel %vm720, %v676, %v736
  %v753 = vsel %vm721, %v679, %v737
  %v754 = vsel %vm722, %v684, %v738
  %v755 = vsel %vm723, %v687, %v739
  %v756 = vsel %vm724, %v692, %v740
  %v757 = vsel %vm725, %v695, %v741
  %v758 = vsel %vm726, %v700, %v742
  %v759 = vsel %vm727, %v703, %v743
  %v760 = vsel %vm728, %v708, %v744
  %v761 = vsel %vm729, %v711, %v745
  %v762 = vpack.c.bf16 %v747, %v746
  %v763 = vpack.c.bf16 %v749, %v748
  %v764 = vpack.c.bf16 %v751, %v750
  %v765 = vpack.c.bf16 %v753, %v752
  %v766 = vpack.c.bf16 %v755, %v754
  %v767 = vpack.c.bf16 %v757, %v756
  %v768 = vpack.c.bf16 %v759, %v758
  %v769 = vpack.c.bf16 %v761, %v760
  %v770 = vld [vmem:[%s7] sm:$0xf]
  %v771 = vld [vmem:[%s7 + $0x4] sm:$0xf]
  %v772 = vld [vmem:[%s7 + $0x8] sm:$0xf]
  %v773 = vld [vmem:[%s7 + $0xc] sm:$0xf]
  %v774 = vld [vmem:[%s7 + $0x10] sm:$0xf]
  %v775 = vld [vmem:[%s7 + $0x14] sm:$0xf]
  %v776 = vld [vmem:[%s7 + $0x18] sm:$0xf]
  %v777 = vld [vmem:[%s7 + $0x1c] sm:$0xf]
  %v778 = vld [vmem:[%s7 + $0x20] sm:$0xf]
  %v779 = vld [vmem:[%s7 + $0x24] sm:$0xf]
  %v780 = vld [vmem:[%s7 + $0x28] sm:$0xf]
  %v781 = vld [vmem:[%s7 + $0x2c] sm:$0xf]
  %v782 = vld [vmem:[%s7 + $0x30] sm:$0xf]
  %v783 = vld [vmem:[%s7 + $0x34] sm:$0xf]
  %v784 = vld [vmem:[%s7 + $0x38] sm:$0xf]
  %v785 = vld [vmem:[%s7 + $0x3c] sm:$0xf]
  %v786 = vld [vmem:[%s8] sm:$0x1]
  %v788 = vlaneseq
  %v789 = vshrl.u32 %v788, 7
  %v790 = vsub.s32 0, %v789
  %v791 = vrot.slane %v786, %v790
  %v809 = vunpack.c.l.b16 %v770
  %v810 = vunpack.c.l.b16 %v771
  %v811 = vunpack.c.l.b16 %v772
  %v812 = vunpack.c.l.b16 %v773
  %v813 = vunpack.c.l.b16 %v774
  %v814 = vunpack.c.l.b16 %v775
  %v815 = vunpack.c.l.b16 %v776
  %v816 = vunpack.c.l.b16 %v777
  %v817 = vunpack.c.l.b16 %v778
  %v818 = vunpack.c.l.b16 %v779
  %v819 = vunpack.c.l.b16 %v780
  %v820 = vunpack.c.l.b16 %v781
  %v821 = vunpack.c.l.b16 %v782
  %v822 = vunpack.c.l.b16 %v783
  %v823 = vunpack.c.l.b16 %v784
  %v824 = vunpack.c.l.b16 %v785
  %v825 = vpack.c.b16 %v810, %v809
  %v826 = vpack.c.b16 %v812, %v811
  %v827 = vpack.c.b16 %v814, %v813
  %v828 = vpack.c.b16 %v816, %v815
  %v829 = vpack.c.b16 %v818, %v817
  %v830 = vpack.c.b16 %v820, %v819
  %v831 = vpack.c.b16 %v822, %v821
  %v832 = vpack.c.b16 %v824, %v823
  %841 = vmatprep.subr.bf16.mxu0 0
  %842 = vmatpush1.bf16.msra.mxu0 %v825
  %843 = vmatprep.subr.bf16.mxu0 0
  %844 = vmatpush1.bf16.msra.mxu0 %v826
  %845 = vmatprep.subr.bf16.mxu0 0
  %846 = vmatpush1.bf16.msra.mxu0 %v827
  %847 = vmatprep.subr.bf16.mxu0 0
  %848 = vmatpush1.bf16.msra.mxu0 %v828
  %849 = vmatprep.subr.bf16.mxu0 0
  %850 = vmatpush1.bf16.msra.mxu0 %v829
  %851 = vmatprep.subr.bf16.mxu0 0
  %852 = vmatpush1.bf16.msra.mxu0 %v830
  %853 = vmatprep.subr.bf16.mxu0 0
  %854 = vmatpush1.bf16.msra.mxu0 %v831
  %855 = vmatprep.subr.bf16.mxu0 0
  %856 = vmatpush1.bf16.msra.mxu0 %v832
  %857 = vmatprep.subr.bf16.mxu0 0
  %858 = vmatpush1.bf16.msra.mxu0 0
  %859 = vmatprep.subr.bf16.mxu0 0
  %860 = vmatpush1.bf16.msra.mxu0 0
  %861 = vmatprep.subr.bf16.mxu0 0
  %862 = vmatpush1.bf16.msra.mxu0 0
  %863 = vmatprep.subr.bf16.mxu0 0
  %864 = vmatpush1.bf16.msra.mxu0 0
  %865 = vmatprep.subr.bf16.mxu0 0
  %866 = vmatpush1.bf16.msra.mxu0 0
  %867 = vmatprep.subr.bf16.mxu0 0
  %868 = vmatpush1.bf16.msra.mxu0 0
  %869 = vmatprep.subr.bf16.mxu0 0
  %870 = vmatpush1.bf16.msra.mxu0 0
  %871 = vmatprep.subr.bf16.mxu0 0
  %872 = vmatpush1.bf16.msra.mxu0 0
  %873 = vmatprep.mubr.bf16.mxu0 0
  %874 = vmatmul.mubr.bf16.gmra.mrb[0].mxu0 %v762
  %v875 = vpop.f32.mrb[0].mxu0
  %v876 = vadd.f32 %v791, %v875
  %v877 = vpop.f32.mrb[0].mxu0
  %v878 = vpop.f32.mrb[0].mxu0
  %v879 = vadd.f32 %v791, %v878
  %v880 = vpop.f32.mrb[0].mxu0
  %881 = vmatprep.mubr.bf16.mxu0 0
  %882 = vmatmul.mubr.bf16.gmra.mrb[0].mxu0 %v763
  %v883 = vpop.f32.mrb[0].mxu0
  %v884 = vadd.f32 %v791, %v883
  %v885 = vpop.f32.mrb[0].mxu0
  %v886 = vpop.f32.mrb[0].mxu0
  %v887 = vadd.f32 %v791, %v886
  %v888 = vpop.f32.mrb[0].mxu0
  %889 = vmatprep.mubr.bf16.mxu0 0
  %890 = vmatmul.mubr.bf16.gmra.mrb[0].mxu0 %v764
  %v891 = vpop.f32.mrb[0].mxu0
  %v892 = vadd.f32 %v791, %v891
  %v893 = vpop.f32.mrb[0].mxu0
  %v894 = vpop.f32.mrb[0].mxu0
  %v895 = vadd.f32 %v791, %v894
  %v896 = vpop.f32.mrb[0].mxu0
  %897 = vmatprep.mubr.bf16.mxu0 0
  %898 = vmatmul.mubr.bf16.gmra.mrb[0].mxu0 %v765
  %v899 = vpop.f32.mrb[0].mxu0
  %v900 = vadd.f32 %v791, %v899
  %v901 = vpop.f32.mrb[0].mxu0
  %v902 = vpop.f32.mrb[0].mxu0
  %v903 = vadd.f32 %v791, %v902
  %v904 = vpop.f32.mrb[0].mxu0
  %905 = vmatprep.mubr.bf16.mxu0 0
  %906 = vmatmul.mubr.bf16.gmra.mrb[0].mxu0 %v766
  %v907 = vpop.f32.mrb[0].mxu0
  %v908 = vadd.f32 %v791, %v907
  %v909 = vpop.f32.mrb[0].mxu0
  %v910 = vpop.f32.mrb[0].mxu0
  %v911 = vadd.f32 %v791, %v910
  %v912 = vpop.f32.mrb[0].mxu0
  %913 = vmatprep.mubr.bf16.mxu0 0
  %914 = vmatmul.mubr.bf16.gmra.mrb[0].mxu0 %v767
  %v915 = vpop.f32.mrb[0].mxu0
  %v916 = vadd.f32 %v791, %v915
  %v917 = vpop.f32.mrb[0].mxu0
  %v918 = vpop.f32.mrb[0].mxu0
  %v919 = vadd.f32 %v791, %v918
  %v920 = vpop.f32.mrb[0].mxu0
  %921 = vmatprep.mubr.bf16.mxu0 0
  %922 = vmatmul.mubr.bf16.gmra.mrb[0].mxu0 %v768
  %v923 = vpop.f32.mrb[0].mxu0
  %v924 = vadd.f32 %v791, %v923
  %v925 = vpop.f32.mrb[0].mxu0
  %v926 = vpop.f32.mrb[0].mxu0
  %v927 = vadd.f32 %v791, %v926
  %v928 = vpop.f32.mrb[0].mxu0
  %929 = vmatprep.mubr.bf16.mxu0 0
  %930 = vmatmul.mubr.bf16.gmra.mrb[0].mxu0 %v769
  %v931 = vpop.f32.mrb[0].mxu0
  %v932 = vadd.f32 %v791, %v931
  %v933 = vpop.f32.mrb[0].mxu0
  %v934 = vpop.f32.mrb[0].mxu0
  %v935 = vadd.f32 %v791, %v934
  %v936 = vpop.f32.mrb[0].mxu0
  %937 = vdwg.mxu0
  %vm938 = vcmask 31744
  %939 = vst.msk [vmem:[%s9] sm:$0xff] %vm938, %v876
  %940 = vst.msk [vmem:[%s9 + $0x8] sm:$0xff] %vm938, %v879
  %941 = vst.msk [vmem:[%s9 + $0x10] sm:$0xff] %vm938, %v884
  %942 = vst.msk [vmem:[%s9 + $0x18] sm:$0xff] %vm938, %v887
  %943 = vst.msk [vmem:[%s9 + $0x20] sm:$0xff] %vm938, %v892
  %944 = vst.msk [vmem:[%s9 + $0x28] sm:$0xff] %vm938, %v895
  %945 = vst.msk [vmem:[%s9 + $0x30] sm:$0xff] %vm938, %v900
  %946 = vst.msk [vmem:[%s9 + $0x38] sm:$0xff] %vm938, %v903
  %947 = vst.msk [vmem:[%s9 + $0x40] sm:$0xff] %vm938, %v908
  %948 = vst.msk [vmem:[%s9 + $0x48] sm:$0xff] %vm938, %v911
  %949 = vst.msk [vmem:[%s9 + $0x50] sm:$0xff] %vm938, %v916
  %950 = vst.msk [vmem:[%s9 + $0x58] sm:$0xff] %vm938, %v919
  %951 = vst.msk [vmem:[%s9 + $0x60] sm:$0xff] %vm938, %v924
  %952 = vst.msk [vmem:[%s9 + $0x68] sm:$0xff] %vm938, %v927
  %953 = vst.msk [vmem:[%s9 + $0x70] sm:$0xff] %vm938, %v932
  %954 = vst.msk [vmem:[%s9 + $0x78] sm:$0xff] %vm938, %v935
  // Predicated region
  $region38: #{tpu_custom_call.1} parent=0 // pred_check
    _
  $region39: #{tpu_custom_call.1} parent=0 // pred_check_branch
    %956 = sbr.rel (0) target = $region41
  $region40: #{tpu_custom_call.1} parent=0 // pred_region
    _
  $region41: #{tpu_custom_call.1} parent=0 // pred_fallthru
    _
  // Predicated region
  $region42: #{tpu_custom_call.1} parent=0 // pred_check
    _
  $region43: #{tpu_custom_call.1} parent=0 // pred_check_branch
    %958 = sbr.rel (0) target = $region45
  $region44: #{tpu_custom_call.1} parent=0 // pred_region
    _
  $region45: #{tpu_custom_call.1} parent=0 // pred_fallthru
    _

</llo_original>
